<compile_context>
chip_gen: v5e
topology: v5e:2x2
jax: 0.10.0
libtpu: 0.0.40
codegen_flags: <defaults>
</compile_context>

<pallas_src>
import math

import jax
import jax.numpy as jnp
from jax.experimental import pallas as pl
from jax.experimental.pallas import tpu as pltpu

_TWO_PI = 2.0 * math.pi
_LANE = 128


def _round_up(n, m):
    return ((n + m - 1) // m) * m


def _learned_sinusoidal_kernel(x_ref, w_ref, out_ref):
    # x_ref:   (1, TB)              batch on the lane axis
    # w_ref:   (half, 1)
    # out_ref: (1 + 2*half, TB)     rows: [x, sin(freqs), cos(freqs)]
    x = x_ref[...]                                   # (1, TB)
    half = w_ref.shape[0]
    # Reassociate the 2*pi scale onto the small (half, 1) operand; keep it
    # in-kernel (pre-scaling in the wrapper would be a separate un-hidden XLA op).
    w2pi = w_ref[...] * _TWO_PI                      # (half, 1)
    freqs = w2pi * x                                 # (half, TB) outer product
    # Full-lane (128-wide) stores; batch is the lane axis.
    out_ref[0:1, :] = x.astype(out_ref.dtype)
    out_ref[1:1 + half, :] = jnp.sin(freqs).astype(out_ref.dtype)
    out_ref[1 + half:, :] = jnp.cos(freqs).astype(out_ref.dtype)


def learned_sinusoidal_pos_emb(
    x,
    weights,
    *,
    block_b=4096,
    target_grid_steps=8,
    vmem_budget_bytes=8 << 20,
    out_dtype=jnp.float32,
    transposed_output=False,
):
    """x: (B,) float, weights: (half_dim,) float -> (B, 1 + 2*half_dim).

    With transposed_output=True, returns the lane-dense (1 + 2*half_dim, B)
    slab (preferred form for a fused consumer).
    """
    assert x.ndim == 1 and weights.ndim == 1
    B = x.shape[0]
    half = weights.shape[0]
    out_dim = 1 + 2 * half

    # Lane tile over the batch: a multiple of 128 lanes, bounded by
    #  - `block_b` (big tiles => few grid steps, big DMAs),
    #  - a VMEM budget so the double-buffered output tile stays small
    #    (matters for large `dim`, esp. on v7x's 64 MiB VMEM),
    #  - a split target so large B still gives >= target_grid_steps grid
    #    steps for the "parallel" axis (keeps both v7x TCs busy; harmless
    #    on single-TC v5e/v6e).
    tb_vmem = max(_LANE, (vmem_budget_bytes // (2 * out_dim * 4)) // _LANE * _LANE)
    tb_split = _round_up(-(-max(B, 1) // max(target_grid_steps, 1)), _LANE)
    tb = max(_LANE, min(block_b, tb_vmem, tb_split))
    b_pad = _round_up(max(B, 1), tb)

    x2 = x.reshape(1, B).astype(jnp.float32)
    if b_pad != B:
        x2 = jnp.pad(x2, ((0, 0), (0, b_pad - B)))
    w2 = weights.reshape(half, 1).astype(jnp.float32)

    out_t = pl.pallas_call(
        _learned_sinusoidal_kernel,
        out_shape=jax.ShapeDtypeStruct((out_dim, b_pad), out_dtype),
        grid=(b_pad // tb,),
        in_specs=[
            pl.BlockSpec((1, tb), lambda i: (0, i)),       # x tile, batch on lanes
            pl.BlockSpec((half, 1), lambda i: (0, 0)),     # weights, reused each tile
        ],
        out_specs=pl.BlockSpec((out_dim, tb), lambda i: (0, i)),
        compiler_params=pltpu.CompilerParams(
            dimension_semantics=("parallel",),             # shard batch grid across TCs
            vmem_limit_bytes=32 * 1024 * 1024,
        ),
    )(x2, w2)

    out_t = out_t if b_pad == B else out_t[:, :B]
    if transposed_output:
        return out_t
    # PyTorch layout (B, 1 + 2*half).
    # TODO(synk): a fused consumer should use transposed_output=True and skip this.
    return out_t.T


if __name__ == "__main__":
    key = jax.random.PRNGKey(0)
    kx, kw = jax.random.split(key)

    B = 8
    dim = 32                       # module arg; must be even
    half_dim = dim // 2

    # Deterministic "learned" parameter (stands in for torch.randn(half_dim)).
    weights = jax.random.normal(kw, (half_dim,), dtype=jnp.float32)
    # Scalar timestep-like inputs, shape (B,).
    x = jax.random.normal(kx, (B,), dtype=jnp.float32)

    def ref_emb(xv, wv):
        freqs = xv[:, None] * wv[None, :] * 2.0 * math.pi
        return jnp.concatenate([xv[:, None], jnp.sin(freqs), jnp.cos(freqs)], axis=-1)

    out = jax.block_until_ready(learned_sinusoidal_pos_emb(x, weights))
    ref = ref_emb(x, weights)
    assert out.shape == (B, dim + 1)
    assert jnp.allclose(out, ref, atol=1e-4, rtol=1e-4)

    # Larger batch: exercises padding + multiple (parallel) grid steps.
    B2 = 1000
    x2 = jax.random.normal(jax.random.PRNGKey(1), (B2,), dtype=jnp.float32)
    out2 = jax.block_until_ready(learned_sinusoidal_pos_emb(x2, weights))
    ref2 = ref_emb(x2, weights)
    assert out2.shape == (B2, dim + 1)
    assert jnp.allclose(out2, ref2, atol=1e-4, rtol=1e-4)

    # Lane-dense (transposed) slab for a fused consumer.
    out2_t = jax.block_until_ready(
        learned_sinusoidal_pos_emb(x2, weights, transposed_output=True))
    assert out2_t.shape == (dim + 1, B2)
    assert jnp.allclose(out2_t.T, ref2, atol=1e-4, rtol=1e-4)

    # Odd half_dim (sublane-misaligned slice stores) still correct.
    dim3 = 10
    w3 = jax.random.normal(jax.random.PRNGKey(2), (dim3 // 2,), dtype=jnp.float32)
    out3 = jax.block_until_ready(learned_sinusoidal_pos_emb(x2, w3))
    assert out3.shape == (B2, dim3 + 1)
    assert jnp.allclose(out3, ref_emb(x2, w3), atol=1e-4, rtol=1e-4)

    # bf16 writeback (halves HBM bytes; mainly a v5e lever).
    out_bf16 = jax.block_until_ready(
        learned_sinusoidal_pos_emb(x, weights, out_dtype=jnp.bfloat16))
    assert out_bf16.dtype == jnp.bfloat16
    assert jnp.allclose(out_bf16.astype(jnp.float32), ref, atol=3e-2, rtol=3e-2)

    print("KERNEL_OK")
</pallas_src>

<mosaic_0001>
module attributes {stable_mosaic.version = 11 : i64} {
  func.func @_learned_sinusoidal_kernel(%arg0: i32, %arg1: memref<1x128xf32, #tpu.memory_space<vmem>>, %arg2: memref<16x1xf32, #tpu.memory_space<vmem>>, %arg3: memref<33x128xf32, #tpu.memory_space<vmem>>) attributes {dimension_semantics = [#tpu.dimension_semantics<parallel>], iteration_bounds = array<i64: 1>, scalar_prefetch = 0 : i64, scratch_operands = 0 : i64, tpu.core_type = #tpu.core_type<tc>, window_params = [{transform_indices = @transform_0, window_bounds = array<i64: 1, 128>}, {pipeline_mode = #tpu.pipeline_mode<synchronous>, transform_indices = @transform_1, window_bounds = array<i64: 16, 1>}, {transform_indices = @transform_2, window_bounds = array<i64: 33, 128>}]} {
    %c0 = arith.constant 0 : index
    %c0_0 = arith.constant 0 : index
    %0 = vector.load %arg1[%c0, %c0_0] : memref<1x128xf32, #tpu.memory_space<vmem>>, vector<1x128xf32>
    %c0_1 = arith.constant 0 : index
    %c0_2 = arith.constant 0 : index
    %1 = vector.load %arg2[%c0_1, %c0_2] : memref<16x1xf32, #tpu.memory_space<vmem>>, vector<16x1xf32>
    %cst = arith.constant 6.28318548 : f32
    %2 = vector.broadcast %cst : f32 to vector<16x1xf32>
    %3 = arith.mulf %1, %2 : vector<16x1xf32>
    %4 = vector.broadcast %3 : vector<16x1xf32> to vector<16x128xf32>
    %5 = vector.broadcast %0 : vector<1x128xf32> to vector<16x128xf32>
    %6 = arith.mulf %4, %5 : vector<16x128xf32>
    %c0_3 = arith.constant 0 : index
    %c0_4 = arith.constant 0 : index
    %7 = vector.load %arg3[%c0_3, %c0_4] : memref<33x128xf32, #tpu.memory_space<vmem>>, vector<1x128xf32>
    tpu.vector_store %arg3[%c0_3, %c0_4], %0 {strides = array<i32>} : memref<33x128xf32, #tpu.memory_space<vmem>>, vector<1x128xf32>,
    %8 = math.sin %6 : vector<16x128xf32>
    %c1 = arith.constant 1 : index
    %c0_5 = arith.constant 0 : index
    %9 = vector.load %arg3[%c1, %c0_5] : memref<33x128xf32, #tpu.memory_space<vmem>>, vector<16x128xf32>
    tpu.vector_store %arg3[%c1, %c0_5], %8 {strides = array<i32>} : memref<33x128xf32, #tpu.memory_space<vmem>>, vector<16x128xf32>,
    %10 = math.cos %6 : vector<16x128xf32>
    %c17 = arith.constant 17 : index
    %c0_6 = arith.constant 0 : index
    %11 = vector.load %arg3[%c17, %c0_6] : memref<33x128xf32, #tpu.memory_space<vmem>>, vector<16x128xf32>
    tpu.vector_store %arg3[%c17, %c0_6], %10 {strides = array<i32>} : memref<33x128xf32, #tpu.memory_space<vmem>>, vector<16x128xf32>,
    return
  }
  func.func @transform_0(%arg0: i32) -> (i32, i32) {
    %c0_i32 = arith.constant 0 : i32
    %c0_i32_0 = arith.constant 0 : i32
    return %c0_i32, %arg0 : i32, i32
  }
  func.func @transform_1(%arg0: i32) -> (i32, i32) {
    %c0_i32 = arith.constant 0 : i32
    %c0_i32_0 = arith.constant 0 : i32
    %c0_i32_1 = arith.constant 0 : i32
    return %c0_i32, %c0_i32_0 : i32, i32
  }
  func.func @transform_2(%arg0: i32) -> (i32, i32) {
    %c0_i32 = arith.constant 0 : i32
    %c0_i32_0 = arith.constant 0 : i32
    return %c0_i32, %arg0 : i32, i32
  }
}

</mosaic_0001>

<llo_original>
// kernel: tpu_custom_call.1
$region0: #{tpu_custom_call.1}
  #allocation0 [shape = 'u32[]', space=smem, size = 0x4, offset = 0x4, fixed_abs, tag = 'smem constant byte address 0x4 - core index']
  #allocation1 [shape = 'u32[72,128]{1,0:T(1,128)}', space=vmem, size = 0x9000, scoped, tag = 'internal scratch']
  %s0 = inlined_call_operand.vmem [shape: f32[1,128], index: 0, kind: input, shape index: {}]
  %s1 = inlined_call_operand.vmem [shape: f32[16,1], index: 1, kind: input, shape index: {}]
  %s2 = inlined_call_operand.hbm [shape: f32[33,128], index: 2, kind: output, shape index: {}]
  %s3 = sld [smem:[#allocation0]]
  $region18: #{tpu_custom_call.1} parent=0
    _
  %s5 = ssub.s32 1, %s3
  %s6 = scalar_select 0, %s5, %s3
  $region1: #{tpu_custom_call.1} parent=0
    #allocation2 [shape = 'u8[20480]{0}', space=vmem, size = 0x5000, scoped, tag = 'output window, operand 0, single buffered']
    #allocation3 [shape = 's32[1]{0}', space=sflag, size = 0x4, scoped, tag = 'scoped memory for tpu_custom_call.1']
    %7 = vsyncpa [#allocation3], 0
    // Predicated region
    $region2: #{tpu_custom_call.1} parent=1 // pred_check
      _
    $region3: #{tpu_custom_call.1} parent=1 // pred_check_branch
      %9 = sbr.rel (0) target = $region5
    $region4: #{tpu_custom_call.1} parent=1 // pred_region
      _
    $region5: #{tpu_custom_call.1} parent=1 // pred_fallthru
      _
    // Predicated region
    $region6: #{tpu_custom_call.1} parent=1 // pred_check
      _
    $region7: #{tpu_custom_call.1} parent=1 // pred_check_branch
      %11 = sbr.rel (0) target = $region9
    $region8: #{tpu_custom_call.1} parent=1 // pred_region
      _
    $region9: #{tpu_custom_call.1} parent=1 // pred_fallthru
      _
    %v12 = vld [vmem:[%s0] sm:$0x1]
    %v13 = vld [vmem:[%s1] sm:$0xff]
    %v14 = vld [vmem:[%s1 + $0x8] sm:$0xff]
    %v15 = vmul.f32 %v13, 6.2831855
    %v16 = vmul.f32 %v14, 6.2831855
    %18 = vset.pattern.permute.xlu0 0
    %19 = vperm.xlu0 %18, %v15
    %v20 = vpop.permute.xlu0 %19
    %23 = vset.pattern.permute.xlu0 0
    %24 = vperm.xlu0 %23, %v16
    %v25 = vpop.permute.xlu0 %24
    %v28 = vperm.slane %v12, 0
    %v30 = vmul.f32 %v20, %v28
    %v31 = vmul.f32 %v25, %v28
    %32 = vst [vmem:[#allocation2] sm:$0x1] %v12
    %v33 = vand.u32 2147483647, %v30
    %vm34 = vcmp.le.f32.partialorder %v33, 0.7853982
    %vm35 = vcmp.lt.s32.totalorder %v30, 0
    %v36 = vand.u32 %v30, 2139095040
    %v37 = vshrl.u32 %v36, 23
    %v38 = vsub.s32 %v37, 127
    %v39 = vand.u32 2147483647, %v30
    %v40 = vand.u32 %v39, 8388607
    %v41 = vor.u32 %v40, 8388608
    %v42 = vsub.s32 0, %v41
    %v43 = vadd.s32 %v38, 1
    %vm44 = vcmp.gt.s32.totalorder %v43, 0
    %v45 = vsel %vm44, %v43, 0
    %v46 = vshrl.u32 %v45, 5
    %v47 = vand.u32 %v45, 31
    %v48 = vsub.s32 32, %v47
    %v49 = vshrl.u32 683565275, %v48
    %v50 = vshll.u32 683565275, %v47
    %v51 = vshrl.u32 2475754826, %v48
    %v52 = vor.u32 %v50, %v51
    %v53 = vshll.u32 2475754826, %v47
    %v54 = vshrl.u32 2131351028, %v48
    %v55 = vor.u32 %v53, %v54
    %v56 = vshll.u32 2131351028, %v47
    %v57 = vshrl.u32 2102212464, %v48
    %v58 = vor.u32 %v56, %v57
    %v59 = vshll.u32 2102212464, %v47
    %v60 = vshrl.u32 920167782, %v48
    %v61 = vor.u32 %v59, %v60
    %v62 = vshll.u32 920167782, %v47
    %v63 = vshrl.u32 1326507024, %v48
    %v64 = vor.u32 %v62, %v63
    %vm65 = vcmp.lt.s32.totalorder %v46, 1
    %vm66 = vcmp.lt.s32.totalorder %v46, 2
    %vm67 = vcmp.lt.s32.totalorder %v46, 3
    %vm68 = vcmp.lt.s32.totalorder %v46, 4
    %v69 = vsel %vm65, %v49, %v52
    %v70 = vsel %vm68, %v58, 2102212464
    %v71 = vsel %vm67, %v55, %v70
    %v72 = vsel %vm66, %v69, %v71
    %v73 = vsel %vm65, %v52, %v55
    %v74 = vsel %vm68, %v61, 920167782
    %v75 = vsel %vm67, %v58, %v74
    %v76 = vsel %vm66, %v73, %v75
    %v77 = vsel %vm65, %v55, %v58
    %v78 = vsel %vm68, %v64, 1326507024
    %v79 = vsel %vm67, %v61, %v78
    %v80 = vsel %vm66, %v77, %v79
    %v81 = vshll.u32 %v41, 8
    %v82 = vand.u32 %v81, 65535
    %v83 = vshrl.u32 %v81, 16
    %v84 = vand.u32 %v80, 65535
    %v85 = vshrl.u32 %v80, 16
    %v86 = vmul.u32 %v82, %v84
    %v87 = vmul.u32 %v82, %v85
    %v88 = vmul.u32 %v83, %v84
    %v89 = vmul.u32 %v83, %v85
    %v90 = vshll.u32 %v87, 16
    %v91 = vshrl.u32 %v87, 16
    %v92 = vshll.u32 %v88, 16
    %v93 = vshrl.u32 %v88, 16
    %vm94 = vc.u32 %v86, %v90
    %v95 = vsel %vm94, 1, 0
    %v96 = vadd.s32 %v86, %v90
    %v97 = vadd.s32 %v89, %v95
    %vm98 = vc.u32 %v96, %v92
    %v99 = vsel %vm98, 1, 0
    %v100 = vadd.s32 %v96, %v92
    %v101 = vadd.s32 %v97, %v99
    %v102 = vadd.s32 %v101, %v91
    %v103 = vadd.s32 %v102, %v93
    %v104 = vand.u32 %v81, 65535
    %v105 = vshrl.u32 %v81, 16
    %v106 = vand.u32 %v76, 65535
    %v107 = vshrl.u32 %v76, 16
    %v108 = vmul.u32 %v104, %v106
    %v109 = vmul.u32 %v104, %v107
    %v110 = vmul.u32 %v105, %v106
    %v111 = vmul.u32 %v105, %v107
    %v112 = vshll.u32 %v109, 16
    %v113 = vshrl.u32 %v109, 16
    %v114 = vshll.u32 %v110, 16
    %v115 = vshrl.u32 %v110, 16
    %vm116 = vc.u32 %v108, %v112
    %v117 = vsel %vm116, 1, 0
    %v118 = vadd.s32 %v108, %v112
    %v119 = vadd.s32 %v111, %v117
    %vm120 = vc.u32 %v118, %v114
    %v121 = vsel %vm120, 1, 0
    %v122 = vadd.s32 %v118, %v114
    %v123 = vadd.s32 %v119, %v121
    %v124 = vadd.s32 %v123, %v113
    %v125 = vadd.s32 %v124, %v115
    %v126 = vmul.u32 %v81, %v72
    %v127 = vadd.s32 %v103, %v122
    %vm128 = vc.u32 %v103, %v122
    %v129 = vadd.s32 %v125, 1
    %v130 = vsel %vm128, %v129, %v125
    %v131 = vadd.s32 %v126, %v130
    %v132 = vadd.s32 %v131, 536870912
    %v133 = vshrl.u32 %v132, 30
    %v134 = vshll.u32 %v133, 30
    %v135 = vsub.s32 %v131, %v134
    %vm136 = vcmp.lt.s32.totalorder %v135, 0
    %v137 = vsub.s32 0, %v135
    %v138 = vsel %vm136, %v137, %v135
    %v139 = vclz %v138
    %v140 = vsub.s32 %v139, 2
    %vm141 = vcmp.gt.s32.totalorder 0, %v140
    %v142 = vsel %vm141, 0, %v140
    %v143 = vsub.s32 32, %v142
    %v144 = vshll.u32 %v135, %v142
    %v145 = vshrl.u32 %v127, %v143
    %v146 = vor.u32 %v144, %v145
    %v147 = vsub.s32 4294967266, %v142
    %v148 = vadd.s32 %v147, 127
    %v149 = vshll.u32 %v148, 23
    %v150 = vor.u32 4788187, %v149
    %v151 = vand.u32 2147483647, %v150
    %v153 = vcvt.s32.f32 %v146
    %v154 = vmul.f32 %v153, %v151
    %v155 = vxor.u32 %v154, 2147483648
    %v156 = vsel %vm35, %v155, %v154
    %v157 = vsub.s32 4, %v133
    %v158 = vsel %vm35, %v157, %v133
    %v159 = vsel %vm34, %v30, %v156
    %v160 = vsel %vm34, 0, %v158
    %v161 = vmul.f32 %v159, %v159
    %v162 = vmul.f32 %v161, -0.001358992
    %v163 = vadd.f32 %v162, 0.041655596
    %v164 = vmul.f32 %v161, %v163
    %v165 = vadd.f32 %v164, -0.4999988
    %v166 = vmul.f32 %v161, %v165
    %v167 = vadd.f32 1.0, %v166
    %v168 = vmul.f32 %v159, %v159
    %v169 = vmul.f32 %v168, -0.00019511016
    %v170 = vadd.f32 %v169, 0.008332121
    %v171 = vmul.f32 %v168, %v170
    %v172 = vadd.f32 %v171, -0.16666654
    %v173 = vmul.f32 %v168, %v172
    %v174 = vadd.f32 %v173, 1.0
    %v175 = vmul.f32 %v174, %v159
    %vm176 = vweird.f32 %v30
    %v177 = vadd.s32 %v160, 3
    %v178 = vand.u32 %v177, 3
    %vm179 = vcmp.lt.s32.totalorder %v178, 2
    %vm180 = vcmp.eq.s32.totalorder %v178, 0
    %v181 = vxor.u32 %v175, 2147483648
    %v182 = vsel %vm180, %v167, %v181
    %vm183 = vcmp.eq.s32.totalorder %v178, 2
    %v184 = vxor.u32 %v167, 2147483648
    %v185 = vsel %vm183, %v184, %v175
    %v186 = vsel %vm179, %v182, %v185
    %v187 = vsel %vm176, nan, %v186
    %v188 = vand.u32 2147483647, %v31
    %vm189 = vcmp.le.f32.partialorder %v188, 0.7853982
    %vm190 = vcmp.lt.s32.totalorder %v31, 0
    %v191 = vand.u32 %v31, 2139095040
    %v192 = vshrl.u32 %v191, 23
    %v193 = vsub.s32 %v192, 127
    %v194 = vand.u32 2147483647, %v31
    %v195 = vand.u32 %v194, 8388607
    %v196 = vor.u32 %v195, 8388608
    %v197 = vsub.s32 0, %v196
    %v198 = vadd.s32 %v193, 1
    %vm199 = vcmp.gt.s32.totalorder %v198, 0
    %v200 = vsel %vm199, %v198, 0
    %v201 = vshrl.u32 %v200, 5
    %v202 = vand.u32 %v200, 31
    %v203 = vsub.s32 32, %v202
    %v204 = vshrl.u32 683565275, %v203
    %v205 = vshll.u32 683565275, %v202
    %v206 = vshrl.u32 2475754826, %v203
    %v207 = vor.u32 %v205, %v206
    %v208 = vshll.u32 2475754826, %v202
    %v209 = vshrl.u32 2131351028, %v203
    %v210 = vor.u32 %v208, %v209
    %v211 = vshll.u32 2131351028, %v202
    %v212 = vshrl.u32 2102212464, %v203
    %v213 = vor.u32 %v211, %v212
    %v214 = vshll.u32 2102212464, %v202
    %v215 = vshrl.u32 920167782, %v203
    %v216 = vor.u32 %v214, %v215
    %v217 = vshll.u32 920167782, %v202
    %v218 = vshrl.u32 1326507024, %v203
    %v219 = vor.u32 %v217, %v218
    %vm220 = vcmp.lt.s32.totalorder %v201, 1
    %vm221 = vcmp.lt.s32.totalorder %v201, 2
    %vm222 = vcmp.lt.s32.totalorder %v201, 3
    %vm223 = vcmp.lt.s32.totalorder %v201, 4
    %v224 = vsel %vm220, %v204, %v207
    %v225 = vsel %vm223, %v213, 2102212464
    %v226 = vsel %vm222, %v210, %v225
    %v227 = vsel %vm221, %v224, %v226
    %v228 = vsel %vm220, %v207, %v210
    %v229 = vsel %vm223, %v216, 920167782
    %v230 = vsel %vm222, %v213, %v229
    %v231 = vsel %vm221, %v228, %v230
    %v232 = vsel %vm220, %v210, %v213
    %v233 = vsel %vm223, %v219, 1326507024
    %v234 = vsel %vm222, %v216, %v233
    %v235 = vsel %vm221, %v232, %v234
    %v236 = vshll.u32 %v196, 8
    %v237 = vand.u32 %v236, 65535
    %v238 = vshrl.u32 %v236, 16
    %v239 = vand.u32 %v235, 65535
    %v240 = vshrl.u32 %v235, 16
    %v241 = vmul.u32 %v237, %v239
    %v242 = vmul.u32 %v237, %v240
    %v243 = vmul.u32 %v238, %v239
    %v244 = vmul.u32 %v238, %v240
    %v245 = vshll.u32 %v242, 16
    %v246 = vshrl.u32 %v242, 16
    %v247 = vshll.u32 %v243, 16
    %v248 = vshrl.u32 %v243, 16
    %vm249 = vc.u32 %v241, %v245
    %v250 = vsel %vm249, 1, 0
    %v251 = vadd.s32 %v241, %v245
    %v252 = vadd.s32 %v244, %v250
    %vm253 = vc.u32 %v251, %v247
    %v254 = vsel %vm253, 1, 0
    %v255 = vadd.s32 %v251, %v247
    %v256 = vadd.s32 %v252, %v254
    %v257 = vadd.s32 %v256, %v246
    %v258 = vadd.s32 %v257, %v248
    %v259 = vand.u32 %v236, 65535
    %v260 = vshrl.u32 %v236, 16
    %v261 = vand.u32 %v231, 65535
    %v262 = vshrl.u32 %v231, 16
    %v263 = vmul.u32 %v259, %v261
    %v264 = vmul.u32 %v259, %v262
    %v265 = vmul.u32 %v260, %v261
    %v266 = vmul.u32 %v260, %v262
    %v267 = vshll.u32 %v264, 16
    %v268 = vshrl.u32 %v264, 16
    %v269 = vshll.u32 %v265, 16
    %v270 = vshrl.u32 %v265, 16
    %vm271 = vc.u32 %v263, %v267
    %v272 = vsel %vm271, 1, 0
    %v273 = vadd.s32 %v263, %v267
    %v274 = vadd.s32 %v266, %v272
    %vm275 = vc.u32 %v273, %v269
    %v276 = vsel %vm275, 1, 0
    %v277 = vadd.s32 %v273, %v269
    %v278 = vadd.s32 %v274, %v276
    %v279 = vadd.s32 %v278, %v268
    %v280 = vadd.s32 %v279, %v270
    %v281 = vmul.u32 %v236, %v227
    %v282 = vadd.s32 %v258, %v277
    %vm283 = vc.u32 %v258, %v277
    %v284 = vadd.s32 %v280, 1
    %v285 = vsel %vm283, %v284, %v280
    %v286 = vadd.s32 %v281, %v285
    %v287 = vadd.s32 %v286, 536870912
    %v288 = vshrl.u32 %v287, 30
    %v289 = vshll.u32 %v288, 30
    %v290 = vsub.s32 %v286, %v289
    %vm291 = vcmp.lt.s32.totalorder %v290, 0
    %v292 = vsub.s32 0, %v290
    %v293 = vsel %vm291, %v292, %v290
    %v294 = vclz %v293
    %v295 = vsub.s32 %v294, 2
    %vm296 = vcmp.gt.s32.totalorder 0, %v295
    %v297 = vsel %vm296, 0, %v295
    %v298 = vsub.s32 32, %v297
    %v299 = vshll.u32 %v290, %v297
    %v300 = vshrl.u32 %v282, %v298
    %v301 = vor.u32 %v299, %v300
    %v302 = vsub.s32 4294967266, %v297
    %v303 = vadd.s32 %v302, 127
    %v304 = vshll.u32 %v303, 23
    %v305 = vor.u32 4788187, %v304
    %v306 = vand.u32 2147483647, %v305
    %v308 = vcvt.s32.f32 %v301
    %v309 = vmul.f32 %v308, %v306
    %v310 = vxor.u32 %v309, 2147483648
    %v311 = vsel %vm190, %v310, %v309
    %v312 = vsub.s32 4, %v288
    %v313 = vsel %vm190, %v312, %v288
    %v314 = vsel %vm189, %v31, %v311
    %v315 = vsel %vm189, 0, %v313
    %v316 = vmul.f32 %v314, %v314
    %v317 = vmul.f32 %v316, -0.001358992
    %v318 = vadd.f32 %v317, 0.041655596
    %v319 = vmul.f32 %v316, %v318
    %v320 = vadd.f32 %v319, -0.4999988
    %v321 = vmul.f32 %v316, %v320
    %v322 = vadd.f32 1.0, %v321
    %v323 = vmul.f32 %v314, %v314
    %v324 = vmul.f32 %v323, -0.00019511016
    %v325 = vadd.f32 %v324, 0.008332121
    %v326 = vmul.f32 %v323, %v325
    %v327 = vadd.f32 %v326, -0.16666654
    %v328 = vmul.f32 %v323, %v327
    %v329 = vadd.f32 %v328, 1.0
    %v330 = vmul.f32 %v329, %v314
    %vm331 = vweird.f32 %v31
    %v332 = vadd.s32 %v315, 3
    %v333 = vand.u32 %v332, 3
    %vm334 = vcmp.lt.s32.totalorder %v333, 2
    %vm335 = vcmp.eq.s32.totalorder %v333, 0
    %v336 = vxor.u32 %v330, 2147483648
    %v337 = vsel %vm335, %v322, %v336
    %vm338 = vcmp.eq.s32.totalorder %v333, 2
    %v339 = vxor.u32 %v322, 2147483648
    %v340 = vsel %vm338, %v339, %v330
    %v341 = vsel %vm334, %v337, %v340
    %v342 = vsel %vm331, nan, %v341
    %343 = vst [vmem:[#allocation2 + $0x1] sm:$0xff] %v187
    %344 = vst [vmem:[#allocation2 + $0x9] sm:$0xff] %v342
    %v345 = vand.u32 2147483647, %v30
    %vm346 = vcmp.le.f32.partialorder %v345, 0.7853982
    %vm347 = vcmp.lt.s32.totalorder %v30, 0
    %v348 = vand.u32 %v30, 2139095040
    %v349 = vshrl.u32 %v348, 23
    %v350 = vsub.s32 %v349, 127
    %v351 = vand.u32 2147483647, %v30
    %v352 = vand.u32 %v351, 8388607
    %v353 = vor.u32 %v352, 8388608
    %v354 = vsub.s32 0, %v353
    %v355 = vadd.s32 %v350, 1
    %vm356 = vcmp.gt.s32.totalorder %v355, 0
    %v357 = vsel %vm356, %v355, 0
    %v358 = vshrl.u32 %v357, 5
    %v359 = vand.u32 %v357, 31
    %v360 = vsub.s32 32, %v359
    %v361 = vshrl.u32 683565275, %v360
    %v362 = vshll.u32 683565275, %v359
    %v363 = vshrl.u32 2475754826, %v360
    %v364 = vor.u32 %v362, %v363
    %v365 = vshll.u32 2475754826, %v359
    %v366 = vshrl.u32 2131351028, %v360
    %v367 = vor.u32 %v365, %v366
    %v368 = vshll.u32 2131351028, %v359
    %v369 = vshrl.u32 2102212464, %v360
    %v370 = vor.u32 %v368, %v369
    %v371 = vshll.u32 2102212464, %v359
    %v372 = vshrl.u32 920167782, %v360
    %v373 = vor.u32 %v371, %v372
    %v374 = vshll.u32 920167782, %v359
    %v375 = vshrl.u32 1326507024, %v360
    %v376 = vor.u32 %v374, %v375
    %vm377 = vcmp.lt.s32.totalorder %v358, 1
    %vm378 = vcmp.lt.s32.totalorder %v358, 2
    %vm379 = vcmp.lt.s32.totalorder %v358, 3
    %vm380 = vcmp.lt.s32.totalorder %v358, 4
    %v381 = vsel %vm377, %v361, %v364
    %v382 = vsel %vm380, %v370, 2102212464
    %v383 = vsel %vm379, %v367, %v382
    %v384 = vsel %vm378, %v381, %v383
    %v385 = vsel %vm377, %v364, %v367
    %v386 = vsel %vm380, %v373, 920167782
    %v387 = vsel %vm379, %v370, %v386
    %v388 = vsel %vm378, %v385, %v387
    %v389 = vsel %vm377, %v367, %v370
    %v390 = vsel %vm380, %v376, 1326507024
    %v391 = vsel %vm379, %v373, %v390
    %v392 = vsel %vm378, %v389, %v391
    %v393 = vshll.u32 %v353, 8
    %v394 = vand.u32 %v393, 65535
    %v395 = vshrl.u32 %v393, 16
    %v396 = vand.u32 %v392, 65535
    %v397 = vshrl.u32 %v392, 16
    %v398 = vmul.u32 %v394, %v396
    %v399 = vmul.u32 %v394, %v397
    %v400 = vmul.u32 %v395, %v396
    %v401 = vmul.u32 %v395, %v397
    %v402 = vshll.u32 %v399, 16
    %v403 = vshrl.u32 %v399, 16
    %v404 = vshll.u32 %v400, 16
    %v405 = vshrl.u32 %v400, 16
    %vm406 = vc.u32 %v398, %v402
    %v407 = vsel %vm406, 1, 0
    %v408 = vadd.s32 %v398, %v402
    %v409 = vadd.s32 %v401, %v407
    %vm410 = vc.u32 %v408, %v404
    %v411 = vsel %vm410, 1, 0
    %v412 = vadd.s32 %v408, %v404
    %v413 = vadd.s32 %v409, %v411
    %v414 = vadd.s32 %v413, %v403
    %v415 = vadd.s32 %v414, %v405
    %v416 = vand.u32 %v393, 65535
    %v417 = vshrl.u32 %v393, 16
    %v418 = vand.u32 %v388, 65535
    %v419 = vshrl.u32 %v388, 16
    %v420 = vmul.u32 %v416, %v418
    %v421 = vmul.u32 %v416, %v419
    %v422 = vmul.u32 %v417, %v418
    %v423 = vmul.u32 %v417, %v419
    %v424 = vshll.u32 %v421, 16
    %v425 = vshrl.u32 %v421, 16
    %v426 = vshll.u32 %v422, 16
    %v427 = vshrl.u32 %v422, 16
    %vm428 = vc.u32 %v420, %v424
    %v429 = vsel %vm428, 1, 0
    %v430 = vadd.s32 %v420, %v424
    %v431 = vadd.s32 %v423, %v429
    %vm432 = vc.u32 %v430, %v426
    %v433 = vsel %vm432, 1, 0
    %v434 = vadd.s32 %v430, %v426
    %v435 = vadd.s32 %v431, %v433
    %v436 = vadd.s32 %v435, %v425
    %v437 = vadd.s32 %v436, %v427
    %v438 = vmul.u32 %v393, %v384
    %v439 = vadd.s32 %v415, %v434
    %vm440 = vc.u32 %v415, %v434
    %v441 = vadd.s32 %v437, 1
    %v442 = vsel %vm440, %v441, %v437
    %v443 = vadd.s32 %v438, %v442
    %v444 = vadd.s32 %v443, 536870912
    %v445 = vshrl.u32 %v444, 30
    %v446 = vshll.u32 %v445, 30
    %v447 = vsub.s32 %v443, %v446
    %vm448 = vcmp.lt.s32.totalorder %v447, 0
    %v449 = vsub.s32 0, %v447
    %v450 = vsel %vm448, %v449, %v447
    %v451 = vclz %v450
    %v452 = vsub.s32 %v451, 2
    %vm453 = vcmp.gt.s32.totalorder 0, %v452
    %v454 = vsel %vm453, 0, %v452
    %v455 = vsub.s32 32, %v454
    %v456 = vshll.u32 %v447, %v454
    %v457 = vshrl.u32 %v439, %v455
    %v458 = vor.u32 %v456, %v457
    %v459 = vsub.s32 4294967266, %v454
    %v460 = vadd.s32 %v459, 127
    %v461 = vshll.u32 %v460, 23
    %v462 = vor.u32 4788187, %v461
    %v463 = vand.u32 2147483647, %v462
    %v465 = vcvt.s32.f32 %v458
    %v466 = vmul.f32 %v465, %v463
    %v467 = vxor.u32 %v466, 2147483648
    %v468 = vsel %vm347, %v467, %v466
    %v469 = vsub.s32 4, %v445
    %v470 = vsel %vm347, %v469, %v445
    %v471 = vsel %vm346, %v30, %v468
    %v472 = vsel %vm346, 0, %v470
    %v473 = vmul.f32 %v471, %v471
    %v474 = vmul.f32 %v473, -0.001358992
    %v475 = vadd.f32 %v474, 0.041655596
    %v476 = vmul.f32 %v473, %v475
    %v477 = vadd.f32 %v476, -0.4999988
    %v478 = vmul.f32 %v473, %v477
    %v479 = vadd.f32 1.0, %v478
    %v480 = vmul.f32 %v471, %v471
    %v481 = vmul.f32 %v480, -0.00019511016
    %v482 = vadd.f32 %v481, 0.008332121
    %v483 = vmul.f32 %v480, %v482
    %v484 = vadd.f32 %v483, -0.16666654
    %v485 = vmul.f32 %v480, %v484
    %v486 = vadd.f32 %v485, 1.0
    %v487 = vmul.f32 %v486, %v471
    %vm488 = vweird.f32 %v30
    %v489 = vand.u32 %v472, 3
    %vm490 = vcmp.lt.s32.totalorder %v489, 2
    %vm491 = vcmp.eq.s32.totalorder %v489, 0
    %v492 = vxor.u32 %v487, 2147483648
    %v493 = vsel %vm491, %v479, %v492
    %vm494 = vcmp.eq.s32.totalorder %v489, 2
    %v495 = vxor.u32 %v479, 2147483648
    %v496 = vsel %vm494, %v495, %v487
    %v497 = vsel %vm490, %v493, %v496
    %v498 = vsel %vm488, nan, %v497
    %v499 = vand.u32 2147483647, %v31
    %vm500 = vcmp.le.f32.partialorder %v499, 0.7853982
    %vm501 = vcmp.lt.s32.totalorder %v31, 0
    %v502 = vand.u32 %v31, 2139095040
    %v503 = vshrl.u32 %v502, 23
    %v504 = vsub.s32 %v503, 127
    %v505 = vand.u32 2147483647, %v31
    %v506 = vand.u32 %v505, 8388607
    %v507 = vor.u32 %v506, 8388608
    %v508 = vsub.s32 0, %v507
    %v509 = vadd.s32 %v504, 1
    %vm510 = vcmp.gt.s32.totalorder %v509, 0
    %v511 = vsel %vm510, %v509, 0
    %v512 = vshrl.u32 %v511, 5
    %v513 = vand.u32 %v511, 31
    %v514 = vsub.s32 32, %v513
    %v515 = vshrl.u32 683565275, %v514
    %v516 = vshll.u32 683565275, %v513
    %v517 = vshrl.u32 2475754826, %v514
    %v518 = vor.u32 %v516, %v517
    %v519 = vshll.u32 2475754826, %v513
    %v520 = vshrl.u32 2131351028, %v514
    %v521 = vor.u32 %v519, %v520
    %v522 = vshll.u32 2131351028, %v513
    %v523 = vshrl.u32 2102212464, %v514
    %v524 = vor.u32 %v522, %v523
    %v525 = vshll.u32 2102212464, %v513
    %v526 = vshrl.u32 920167782, %v514
    %v527 = vor.u32 %v525, %v526
    %v528 = vshll.u32 920167782, %v513
    %v529 = vshrl.u32 1326507024, %v514
    %v530 = vor.u32 %v528, %v529
    %vm531 = vcmp.lt.s32.totalorder %v512, 1
    %vm532 = vcmp.lt.s32.totalorder %v512, 2
    %vm533 = vcmp.lt.s32.totalorder %v512, 3
    %vm534 = vcmp.lt.s32.totalorder %v512, 4
    %v535 = vsel %vm531, %v515, %v518
    %v536 = vsel %vm534, %v524, 2102212464
    %v537 = vsel %vm533, %v521, %v536
    %v538 = vsel %vm532, %v535, %v537
    %v539 = vsel %vm531, %v518, %v521
    %v540 = vsel %vm534, %v527, 920167782
    %v541 = vsel %vm533, %v524, %v540
    %v542 = vsel %vm532, %v539, %v541
    %v543 = vsel %vm531, %v521, %v524
    %v544 = vsel %vm534, %v530, 1326507024
    %v545 = vsel %vm533, %v527, %v544
    %v546 = vsel %vm532, %v543, %v545
    %v547 = vshll.u32 %v507, 8
    %v548 = vand.u32 %v547, 65535
    %v549 = vshrl.u32 %v547, 16
    %v550 = vand.u32 %v546, 65535
    %v551 = vshrl.u32 %v546, 16
    %v552 = vmul.u32 %v548, %v550
    %v553 = vmul.u32 %v548, %v551
    %v554 = vmul.u32 %v549, %v550
    %v555 = vmul.u32 %v549, %v551
    %v556 = vshll.u32 %v553, 16
    %v557 = vshrl.u32 %v553, 16
    %v558 = vshll.u32 %v554, 16
    %v559 = vshrl.u32 %v554, 16
    %vm560 = vc.u32 %v552, %v556
    %v561 = vsel %vm560, 1, 0
    %v562 = vadd.s32 %v552, %v556
    %v563 = vadd.s32 %v555, %v561
    %vm564 = vc.u32 %v562, %v558
    %v565 = vsel %vm564, 1, 0
    %v566 = vadd.s32 %v562, %v558
    %v567 = vadd.s32 %v563, %v565
    %v568 = vadd.s32 %v567, %v557
    %v569 = vadd.s32 %v568, %v559
    %v570 = vand.u32 %v547, 65535
    %v571 = vshrl.u32 %v547, 16
    %v572 = vand.u32 %v542, 65535
    %v573 = vshrl.u32 %v542, 16
    %v574 = vmul.u32 %v570, %v572
    %v575 = vmul.u32 %v570, %v573
    %v576 = vmul.u32 %v571, %v572
    %v577 = vmul.u32 %v571, %v573
    %v578 = vshll.u32 %v575, 16
    %v579 = vshrl.u32 %v575, 16
    %v580 = vshll.u32 %v576, 16
    %v581 = vshrl.u32 %v576, 16
    %vm582 = vc.u32 %v574, %v578
    %v583 = vsel %vm582, 1, 0
    %v584 = vadd.s32 %v574, %v578
    %v585 = vadd.s32 %v577, %v583
    %vm586 = vc.u32 %v584, %v580
    %v587 = vsel %vm586, 1, 0
    %v588 = vadd.s32 %v584, %v580
    %v589 = vadd.s32 %v585, %v587
    %v590 = vadd.s32 %v589, %v579
    %v591 = vadd.s32 %v590, %v581
    %v592 = vmul.u32 %v547, %v538
    %v593 = vadd.s32 %v569, %v588
    %vm594 = vc.u32 %v569, %v588
    %v595 = vadd.s32 %v591, 1
    %v596 = vsel %vm594, %v595, %v591
    %v597 = vadd.s32 %v592, %v596
    %v598 = vadd.s32 %v597, 536870912
    %v599 = vshrl.u32 %v598, 30
    %v600 = vshll.u32 %v599, 30
    %v601 = vsub.s32 %v597, %v600
    %vm602 = vcmp.lt.s32.totalorder %v601, 0
    %v603 = vsub.s32 0, %v601
    %v604 = vsel %vm602, %v603, %v601
    %v605 = vclz %v604
    %v606 = vsub.s32 %v605, 2
    %vm607 = vcmp.gt.s32.totalorder 0, %v606
    %v608 = vsel %vm607, 0, %v606
    %v609 = vsub.s32 32, %v608
    %v610 = vshll.u32 %v601, %v608
    %v611 = vshrl.u32 %v593, %v609
    %v612 = vor.u32 %v610, %v611
    %v613 = vsub.s32 4294967266, %v608
    %v614 = vadd.s32 %v613, 127
    %v615 = vshll.u32 %v614, 23
    %v616 = vor.u32 4788187, %v615
    %v617 = vand.u32 2147483647, %v616
    %v619 = vcvt.s32.f32 %v612
    %v620 = vmul.f32 %v619, %v617
    %v621 = vxor.u32 %v620, 2147483648
    %v622 = vsel %vm501, %v621, %v620
    %v623 = vsub.s32 4, %v599
    %v624 = vsel %vm501, %v623, %v599
    %v625 = vsel %vm500, %v31, %v622
    %v626 = vsel %vm500, 0, %v624
    %v627 = vmul.f32 %v625, %v625
    %v628 = vmul.f32 %v627, -0.001358992
    %v629 = vadd.f32 %v628, 0.041655596
    %v630 = vmul.f32 %v627, %v629
    %v631 = vadd.f32 %v630, -0.4999988
    %v632 = vmul.f32 %v627, %v631
    %v633 = vadd.f32 1.0, %v632
    %v634 = vmul.f32 %v625, %v625
    %v635 = vmul.f32 %v634, -0.00019511016
    %v636 = vadd.f32 %v635, 0.008332121
    %v637 = vmul.f32 %v634, %v636
    %v638 = vadd.f32 %v637, -0.16666654
    %v639 = vmul.f32 %v634, %v638
    %v640 = vadd.f32 %v639, 1.0
    %v641 = vmul.f32 %v640, %v625
    %vm642 = vweird.f32 %v31
    %v643 = vand.u32 %v626, 3
    %vm644 = vcmp.lt.s32.totalorder %v643, 2
    %vm645 = vcmp.eq.s32.totalorder %v643, 0
    %v646 = vxor.u32 %v641, 2147483648
    %v647 = vsel %vm645, %v633, %v646
    %vm648 = vcmp.eq.s32.totalorder %v643, 2
    %v649 = vxor.u32 %v633, 2147483648
    %v650 = vsel %vm648, %v649, %v641
    %v651 = vsel %vm644, %v647, %v650
    %v652 = vsel %vm642, nan, %v651
    %653 = vst [vmem:[#allocation2 + $0x11] sm:$0xff] %v498
    %654 = vst [vmem:[#allocation2 + $0x19] sm:$0xff] %v652
    // Predicated region
    $region10: #{tpu_custom_call.1} parent=1 // pred_check
      _
    $region11: #{tpu_custom_call.1} parent=1 // pred_check_branch
      %656 = sbr.rel (0) target = $region13
    $region12: #{tpu_custom_call.1} parent=1 // pred_region
      %658 = vsyncadd [#allocation3], 0
      %s659 = sshll.u32 [#allocation2], 4
      %s660 = int_to_ptr.vmem [resolvable:$true] %s659
      %s661 = sshll.u32 %s2, 4
      %s662 = int_to_ptr.hbm [resolvable:$true] %s661
      %667 = dma.vmem_to_hbm [thread:$0]  %s660, 640, %s662, [#allocation3], 128, 128, 8
    $region13: #{tpu_custom_call.1} parent=1 // pred_fallthru
      _
    // Predicated region
    $region14: #{tpu_custom_call.1} parent=1 // pred_check
      _
    $region15: #{tpu_custom_call.1} parent=1 // pred_check_branch
      %669 = sbr.rel (0) target = $region17
    $region16: #{tpu_custom_call.1} parent=1 // pred_region
      %671 = dma.done [#allocation3], 640
    $region17: #{tpu_custom_call.1} parent=1 // pred_fallthru
      _
    %672 = vsyncpa [#allocation3], 1

</llo_original>
